<compile_context>
chip_gen: v7x
topology: tpu7x:2x2x1
jax: 0.10.0
libtpu: 0.0.40
codegen_flags: <defaults>
</compile_context>

<pallas_src>
import functools

import jax
import jax.numpy as jnp
from jax.experimental import pallas as pl
from jax.experimental.pallas import tpu as pltpu

_NEG = -1e30  # finite "minus infinity" for padded logit columns


def _round_up(x, m):
    return (x + m - 1) // m * m


def _actor_kernel(obs_ref, act_ref,
                  w1_ref, b1_ref, w2_ref, b2_ref, w3_ref, b3_ref,
                  out_ref, *, act_dim):
    # obs arrives as f32; cast to bf16 in-kernel (MXU operands), accumulate in f32.
    x = obs_ref[...].astype(jnp.bfloat16)                         # (bn, obs_dim)

    h1 = jnp.tanh(jnp.dot(x, w1_ref[...],
                          preferred_element_type=jnp.float32) + b1_ref[...])
    h2 = jnp.tanh(jnp.dot(h1.astype(jnp.bfloat16), w2_ref[...],
                          preferred_element_type=jnp.float32) + b2_ref[...])
    logits = jnp.dot(h2.astype(jnp.bfloat16), w3_ref[...],
                     preferred_element_type=jnp.float32) + b3_ref[...]
    # logits: (bn, pad_dim); padded columns carry ~-1e30 from the padded bias.

    # Stable log-softmax with the gather folded in (no materialized one-hot).
    m = jnp.max(logits, axis=-1, keepdims=True)
    z = logits - m
    lse = jnp.log(jnp.sum(jnp.exp(z), axis=-1, keepdims=True))
    cols = jax.lax.broadcasted_iota(jnp.int32, logits.shape, 1)   # (bn, pad_dim)
    sel = act_ref[...]                                            # (bn, 1) int32
    logp = jnp.sum(jnp.where(cols == sel, z, 0.0),
                   axis=-1, keepdims=True) - lse                  # (bn, 1)

    # Narrow store: real logits in cols [0, act_dim), log_prob in col act_dim.
    slab = jnp.where(cols == act_dim, logp, logits)
    out_ref[...] = slab[:, :act_dim + 1]


def prepare_params(params):
    """One-time prep (call at init / when params change, NOT every forward):
    bf16 weight casts and padding of the last layer to a lane-dense width."""
    w1, b1, w2, b2, w3, b3 = params
    act_dim = w3.shape[1]
    pad_dim = _round_up(act_dim + 1, 128)
    w1b = w1.astype(jnp.bfloat16)
    w2b = w2.astype(jnp.bfloat16)
    w3b = jnp.pad(w3, ((0, 0), (0, pad_dim - act_dim))).astype(jnp.bfloat16)
    b3p = jnp.pad(b3, ((0, 0), (0, pad_dim - act_dim)), constant_values=_NEG)
    return (w1b, b1, w2b, b2, w3b, b3p)


@functools.partial(jax.jit, static_argnames=("act_dim",))
def actor_forward(obs, act, prep_params, *, act_dim):
    """Returns (logits, log_prob) matching Actor.forward(obs, act).

    The Categorical distribution is represented by its logits; log_prob has
    shape (n,).  `prep_params` must come from prepare_params(params).
    """
    # TODO(synk): the act=None branch of Actor.forward (return logits only, no
    # log_prob) is handled by the caller; this kernel always computes log_prob.
    w1b, b1, w2b, b2, w3b, b3p = prep_params
    n, obs_dim = obs.shape
    h1 = w1b.shape[1]
    h2 = w2b.shape[1]
    pad_dim = w3b.shape[1]

    # Batch row tile: large enough to amortize per-step overhead, and for
    # n > 64 split into >= 2 grid steps so v7x can use both TensorCores.
    if n <= 64:
        block_n = _round_up(n, 16)
    else:
        block_n = min(1024, _round_up(pl.cdiv(n, 2), 16))
    n_pad = _round_up(n, block_n)

    if act.dtype != jnp.int32:
        act = act.astype(jnp.int32)
    if n_pad != n:
        obs_p = jnp.pad(obs, ((0, n_pad - n), (0, 0)))
        act_p = jnp.pad(act, ((0, n_pad - n), (0, 0)))
    else:
        obs_p, act_p = obs, act

    grid = (n_pad // block_n,)
    row_spec = lambda width: pl.BlockSpec((block_n, width), lambda i: (i, 0))
    resident = lambda shape: pl.BlockSpec(shape, lambda i: (0, 0))  # VMEM-resident

    out_w = act_dim + 1
    cost = pl.CostEstimate(
        flops=2 * n_pad * (obs_dim * h1 + h1 * h2 + h2 * pad_dim),
        transcendentals=n_pad * (h1 + h2 + pad_dim),
        bytes_accessed=(obs_p.size * 4 + act_p.size * 4
                        + (w1b.size + w2b.size + w3b.size) * 2
                        + (b1.size + b2.size + b3p.size) * 4
                        + n_pad * out_w * 4),
    )

    out = pl.pallas_call(
        functools.partial(_actor_kernel, act_dim=act_dim),
        out_shape=jax.ShapeDtypeStruct((n_pad, out_w), jnp.float32),
        grid=grid,
        in_specs=[
            row_spec(obs_dim), row_spec(1),
            resident(w1b.shape), resident(b1.shape),
            resident(w2b.shape), resident(b2.shape),
            resident(w3b.shape), resident(b3p.shape),
        ],
        out_specs=row_spec(out_w),
        compiler_params=pltpu.CompilerParams(
            dimension_semantics=("parallel",)),
        cost_estimate=cost,
    )(obs_p, act_p, w1b, b1, w2b, b2, w3b, b3p)

    logits = out[:n, :act_dim]
    log_prob = out[:n, act_dim]
    return logits, log_prob


def init_params(key, obs_dim, hidden_sizes, act_dim):
    """Deterministic parameter init.  Weights stored as (in_dim, out_dim)."""
    sizes = [obs_dim] + list(hidden_sizes) + [act_dim]
    params = []
    for i in range(3):
        key, kw, kb = jax.random.split(key, 3)
        fan_in, fan_out = sizes[i], sizes[i + 1]
        bound = 1.0 / jnp.sqrt(fan_in)
        w = jax.random.uniform(kw, (fan_in, fan_out), jnp.float32, -bound, bound)
        b = jax.random.uniform(kb, (1, fan_out), jnp.float32, -bound, bound)
        params += [w, b]
    return tuple(params)


def _reference(obs, act, params):
    """Pure-JAX reference with the same bf16-operand / f32-accumulate numerics."""
    w1, b1, w2, b2, w3, b3 = params
    x = obs.astype(jnp.bfloat16)
    h1 = jnp.tanh(jnp.dot(x, w1.astype(jnp.bfloat16),
                          preferred_element_type=jnp.float32) + b1)
    h2 = jnp.tanh(jnp.dot(h1.astype(jnp.bfloat16), w2.astype(jnp.bfloat16),
                          preferred_element_type=jnp.float32) + b2)
    logits = jnp.dot(h2.astype(jnp.bfloat16), w3.astype(jnp.bfloat16),
                     preferred_element_type=jnp.float32) + b3
    log_sm = jax.nn.log_softmax(logits, axis=-1)
    logp = jnp.take_along_axis(log_sm, act, axis=-1)[:, 0]
    return logits, logp


if __name__ == "__main__":
    key = jax.random.PRNGKey(0)

    n, obs_dim, act_dim = 8, 16, 4
    hidden_sizes = (32, 32)

    k_obs, k_act, k_par = jax.random.split(key, 3)
    obs = jax.random.normal(k_obs, (n, obs_dim), dtype=jnp.float32)
    act = jax.random.randint(k_act, (n, 1), 0, act_dim, dtype=jnp.int32)
    params = init_params(k_par, obs_dim, hidden_sizes, act_dim)
    prep = prepare_params(params)          # one-time bf16 cast / padding

    logits, log_prob = actor_forward(obs, act, prep, act_dim=act_dim)
    jax.block_until_ready((logits, log_prob))

    ref_logits, ref_logp = _reference(obs, act, params)
    assert logits.shape == (n, act_dim)
    assert log_prob.shape == (n,)
    assert jnp.allclose(logits, ref_logits, atol=1e-3, rtol=1e-3)
    assert jnp.allclose(log_prob, ref_logp, atol=1e-3, rtol=1e-3)

    print("KERNEL_OK")
</pallas_src>

<mosaic_0001>
module attributes {stable_mosaic.version = 11 : i64} {
  func.func @_actor_kernel(%arg0: i32, %arg1: memref<16x16xf32, #tpu.memory_space<vmem>>, %arg2: memref<16x1xi32, #tpu.memory_space<vmem>>, %arg3: memref<16x32xbf16, #tpu.memory_space<vmem>>, %arg4: memref<1x32xf32, #tpu.memory_space<vmem>>, %arg5: memref<32x32xbf16, #tpu.memory_space<vmem>>, %arg6: memref<1x32xf32, #tpu.memory_space<vmem>>, %arg7: memref<32x128xbf16, #tpu.memory_space<vmem>>, %arg8: memref<1x128xf32, #tpu.memory_space<vmem>>, %arg9: memref<16x5xf32, #tpu.memory_space<vmem>>) attributes {dimension_semantics = [#tpu.dimension_semantics<parallel>], iteration_bounds = array<i64: 1>, scalar_prefetch = 0 : i64, scratch_operands = 0 : i64, tpu.core_type = #tpu.core_type<tc>, window_params = [{transform_indices = @transform_0, window_bounds = array<i64: 16, 16>}, {transform_indices = @transform_1, window_bounds = array<i64: 16, 1>}, {pipeline_mode = #tpu.pipeline_mode<synchronous>, transform_indices = @transform_2, window_bounds = array<i64: 16, 32>}, {pipeline_mode = #tpu.pipeline_mode<synchronous>, transform_indices = @transform_3, window_bounds = array<i64: 1, 32>}, {pipeline_mode = #tpu.pipeline_mode<synchronous>, transform_indices = @transform_4, window_bounds = array<i64: 32, 32>}, {pipeline_mode = #tpu.pipeline_mode<synchronous>, transform_indices = @transform_5, window_bounds = array<i64: 1, 32>}, {pipeline_mode = #tpu.pipeline_mode<synchronous>, transform_indices = @transform_6, window_bounds = array<i64: 32, 128>}, {pipeline_mode = #tpu.pipeline_mode<synchronous>, transform_indices = @transform_7, window_bounds = array<i64: 1, 128>}, {transform_indices = @transform_8, window_bounds = array<i64: 16, 5>}]} {
    %c0 = arith.constant 0 : index
    %c0_0 = arith.constant 0 : index
    %0 = vector.load %arg1[%c0, %c0_0] : memref<16x16xf32, #tpu.memory_space<vmem>>, vector<16x16xf32>
    %1 = arith.truncf %0 : vector<16x16xf32> to vector<16x16xbf16>
    %c0_1 = arith.constant 0 : index
    %c0_2 = arith.constant 0 : index
    %2 = vector.load %arg3[%c0_1, %c0_2] : memref<16x32xbf16, #tpu.memory_space<vmem>>, vector<16x32xbf16>
    %cst = arith.constant dense<0.000000e+00> : vector<16x32xf32>
    %3 = tpu.matmul %1, %2, %cst {dimension_numbers = #tpu.dot_dimension_numbers<[1], [0], [0], [1], [0, 0, 1, 1], [], []>} : vector<16x16xbf16>, vector<16x32xbf16>, vector<16x32xf32> -> vector<16x32xf32>
    %c0_3 = arith.constant 0 : index
    %c0_4 = arith.constant 0 : index
    %4 = vector.load %arg4[%c0_3, %c0_4] : memref<1x32xf32, #tpu.memory_space<vmem>>, vector<1x32xf32>
    %5 = vector.broadcast %4 : vector<1x32xf32> to vector<16x32xf32>
    %6 = arith.addf %3, %5 : vector<16x32xf32>
    %7 = math.tanh %6 : vector<16x32xf32>
    %8 = arith.truncf %7 : vector<16x32xf32> to vector<16x32xbf16>
    %c0_5 = arith.constant 0 : index
    %c0_6 = arith.constant 0 : index
    %9 = vector.load %arg5[%c0_5, %c0_6] : memref<32x32xbf16, #tpu.memory_space<vmem>>, vector<32x32xbf16>
    %cst_7 = arith.constant dense<0.000000e+00> : vector<16x32xf32>
    %10 = tpu.matmul %8, %9, %cst_7 {dimension_numbers = #tpu.dot_dimension_numbers<[1], [0], [0], [1], [0, 0, 1, 1], [], []>} : vector<16x32xbf16>, vector<32x32xbf16>, vector<16x32xf32> -> vector<16x32xf32>
    %c0_8 = arith.constant 0 : index
    %c0_9 = arith.constant 0 : index
    %11 = vector.load %arg6[%c0_8, %c0_9] : memref<1x32xf32, #tpu.memory_space<vmem>>, vector<1x32xf32>
    %12 = vector.broadcast %11 : vector<1x32xf32> to vector<16x32xf32>
    %13 = arith.addf %10, %12 : vector<16x32xf32>
    %14 = math.tanh %13 : vector<16x32xf32>
    %15 = arith.truncf %14 : vector<16x32xf32> to vector<16x32xbf16>
    %c0_10 = arith.constant 0 : index
    %c0_11 = arith.constant 0 : index
    %16 = vector.load %arg7[%c0_10, %c0_11] : memref<32x128xbf16, #tpu.memory_space<vmem>>, vector<32x128xbf16>
    %cst_12 = arith.constant dense<0.000000e+00> : vector<16x128xf32>
    %17 = tpu.matmul %15, %16, %cst_12 {dimension_numbers = #tpu.dot_dimension_numbers<[1], [0], [0], [1], [0, 0, 1, 1], [], []>} : vector<16x32xbf16>, vector<32x128xbf16>, vector<16x128xf32> -> vector<16x128xf32>
    %c0_13 = arith.constant 0 : index
    %c0_14 = arith.constant 0 : index
    %18 = vector.load %arg8[%c0_13, %c0_14] : memref<1x128xf32, #tpu.memory_space<vmem>>, vector<1x128xf32>
    %19 = vector.broadcast %18 : vector<1x128xf32> to vector<16x128xf32>
    %20 = arith.addf %17, %19 : vector<16x128xf32>
    %cst_15 = arith.constant dense<0xFF800000> : vector<16xf32>
    %21 = vector.multi_reduction <maximumf>, %20, %cst_15 [1] : vector<16x128xf32> to vector<16xf32>
    %22 = vector.shape_cast %21 : vector<16xf32> to vector<16x1xf32>
    %23 = vector.broadcast %22 : vector<16x1xf32> to vector<16x128xf32>
    %24 = arith.subf %20, %23 : vector<16x128xf32>
    %25 = math.exp %24 : vector<16x128xf32>
    %cst_16 = arith.constant dense<0.000000e+00> : vector<16xf32>
    %26 = vector.multi_reduction <add>, %25, %cst_16 [1] : vector<16x128xf32> to vector<16xf32>
    %27 = vector.shape_cast %26 : vector<16xf32> to vector<16x1xf32>
    %28 = math.log %27 : vector<16x1xf32>
    %29 = tpu.iota {dimensions = array<i32: 1>} : vector<16x128xi32>
    %c0_17 = arith.constant 0 : index
    %c0_18 = arith.constant 0 : index
    %30 = vector.load %arg2[%c0_17, %c0_18] : memref<16x1xi32, #tpu.memory_space<vmem>>, vector<16x1xi32>
    %31 = vector.broadcast %30 : vector<16x1xi32> to vector<16x128xi32>
    %32 = arith.cmpi eq, %29, %31 : vector<16x128xi32>
    %cst_19 = arith.constant 0.000000e+00 : f32
    %33 = vector.broadcast %cst_19 : f32 to vector<16x128xf32>
    %34 = arith.select %32, %24, %33 : vector<16x128xi1>, vector<16x128xf32>
    %cst_20 = arith.constant dense<0.000000e+00> : vector<16xf32>
    %35 = vector.multi_reduction <add>, %34, %cst_20 [1] : vector<16x128xf32> to vector<16xf32>
    %36 = vector.shape_cast %35 : vector<16xf32> to vector<16x1xf32>
    %37 = arith.subf %36, %28 : vector<16x1xf32>
    %c4_i32 = arith.constant 4 : i32
    %38 = vector.broadcast %c4_i32 : i32 to vector<16x128xi32>
    %39 = arith.cmpi eq, %29, %38 : vector<16x128xi32>
    %40 = vector.shape_cast %37 : vector<16x1xf32> to vector<16x1xf32>
    %41 = vector.broadcast %40 : vector<16x1xf32> to vector<16x128xf32>
    %42 = arith.select %39, %41, %20 : vector<16x128xi1>, vector<16x128xf32>
    %43 = vector.extract_strided_slice %42 {offsets = [0, 0], sizes = [16, 5], strides = [1, 1]} : vector<16x128xf32> to vector<16x5xf32>
    %c0_21 = arith.constant 0 : index
    %c0_22 = arith.constant 0 : index
    %44 = vector.load %arg9[%c0_21, %c0_22] : memref<16x5xf32, #tpu.memory_space<vmem>>, vector<16x5xf32>
    tpu.vector_store %arg9[%c0_21, %c0_22], %43 {strides = array<i32>} : memref<16x5xf32, #tpu.memory_space<vmem>>, vector<16x5xf32>,
    return
  }
  func.func @transform_0(%arg0: i32) -> (i32, i32) {
    %c0_i32 = arith.constant 0 : i32
    %c0_i32_0 = arith.constant 0 : i32
    return %arg0, %c0_i32 : i32, i32
  }
  func.func @transform_1(%arg0: i32) -> (i32, i32) {
    %c0_i32 = arith.constant 0 : i32
    %c0_i32_0 = arith.constant 0 : i32
    return %arg0, %c0_i32 : i32, i32
  }
  func.func @transform_2(%arg0: i32) -> (i32, i32) {
    %c0_i32 = arith.constant 0 : i32
    %c0_i32_0 = arith.constant 0 : i32
    %c0_i32_1 = arith.constant 0 : i32
    return %c0_i32, %c0_i32_0 : i32, i32
  }
  func.func @transform_3(%arg0: i32) -> (i32, i32) {
    %c0_i32 = arith.constant 0 : i32
    %c0_i32_0 = arith.constant 0 : i32
    %c0_i32_1 = arith.constant 0 : i32
    return %c0_i32, %c0_i32_0 : i32, i32
  }
  func.func @transform_4(%arg0: i32) -> (i32, i32) {
    %c0_i32 = arith.constant 0 : i32
    %c0_i32_0 = arith.constant 0 : i32
    %c0_i32_1 = arith.constant 0 : i32
    return %c0_i32, %c0_i32_0 : i32, i32
  }
  func.func @transform_5(%arg0: i32) -> (i32, i32) {
    %c0_i32 = arith.constant 0 : i32
    %c0_i32_0 = arith.constant 0 : i32
    %c0_i32_1 = arith.constant 0 : i32
    return %c0_i32, %c0_i32_0 : i32, i32
  }
  func.func @transform_6(%arg0: i32) -> (i32, i32) {
    %c0_i32 = arith.constant 0 : i32
    %c0_i32_0 = arith.constant 0 : i32
    %c0_i32_1 = arith.constant 0 : i32
    return %c0_i32, %c0_i32_0 : i32, i32
  }
  func.func @transform_7(%arg0: i32) -> (i32, i32) {
    %c0_i32 = arith.constant 0 : i32
    %c0_i32_0 = arith.constant 0 : i32
    %c0_i32_1 = arith.constant 0 : i32
    return %c0_i32, %c0_i32_0 : i32, i32
  }
  func.func @transform_8(%arg0: i32) -> (i32, i32) {
    %c0_i32 = arith.constant 0 : i32
    %c0_i32_0 = arith.constant 0 : i32
    return %arg0, %c0_i32 : i32, i32
  }
}

</mosaic_0001>

<llo_original>
// kernel: actor_forward.1
$region0: #{actor_forward.1}
  #allocation0 [shape = 'u32[]', space=smem, size = 0x4, offset = 0x4, fixed_abs, tag = 'smem constant byte address 0x4 - core index']
  #allocation1 [shape = 'u32[144,128]{1,0:T(1,128)}', space=vmem, size = 0x12000, scoped, tag = 'internal scratch']
  %s0 = inlined_call_operand.vmem [shape: f32[16,16], index: 0, kind: input, shape index: {}]
  %s1 = inlined_call_operand.vmem [shape: s32[16,1], index: 1, kind: input, shape index: {}]
  %s2 = inlined_call_operand.vmem [shape: bf16[16,32], index: 2, kind: input, shape index: {}]
  %s3 = inlined_call_operand.vmem [shape: f32[1,32], index: 3, kind: input, shape index: {}]
  %s4 = inlined_call_operand.vmem [shape: bf16[32,32], index: 4, kind: input, shape index: {}]
  %s5 = inlined_call_operand.vmem [shape: f32[1,32], index: 5, kind: input, shape index: {}]
  %s6 = inlined_call_operand.vmem [shape: bf16[32,128], index: 6, kind: input, shape index: {}]
  %s7 = inlined_call_operand.vmem [shape: f32[1,128], index: 7, kind: input, shape index: {}]
  %s8 = inlined_call_operand.vmem [shape: f32[16,5], index: 8, kind: output, shape index: {}]
  %s9 = sld [smem:[#allocation0]]
  $region42: #{actor_forward.1} parent=0
    _
  %s11 = ssub.s32 1, %s9
  %s12 = scalar_select 0, %s11, %s9
  // Predicated region
  $region2: #{actor_forward.1} parent=0 // pred_check
    _
  $region3: #{actor_forward.1} parent=0 // pred_check_branch
    %14 = sbr.rel (0) target = $region5
  $region4: #{actor_forward.1} parent=0 // pred_region
    _
  $region5: #{actor_forward.1} parent=0 // pred_fallthru
    _
  // Predicated region
  $region6: #{actor_forward.1} parent=0 // pred_check
    _
  $region7: #{actor_forward.1} parent=0 // pred_check_branch
    %16 = sbr.rel (0) target = $region9
  $region8: #{actor_forward.1} parent=0 // pred_region
    _
  $region9: #{actor_forward.1} parent=0 // pred_fallthru
    _
  // Predicated region
  $region10: #{actor_forward.1} parent=0 // pred_check
    _
  $region11: #{actor_forward.1} parent=0 // pred_check_branch
    %18 = sbr.rel (0) target = $region13
  $region12: #{actor_forward.1} parent=0 // pred_region
    _
  $region13: #{actor_forward.1} parent=0 // pred_fallthru
    _
  // Predicated region
  $region14: #{actor_forward.1} parent=0 // pred_check
    _
  $region15: #{actor_forward.1} parent=0 // pred_check_branch
    %20 = sbr.rel (0) target = $region17
  $region16: #{actor_forward.1} parent=0 // pred_region
    _
  $region17: #{actor_forward.1} parent=0 // pred_fallthru
    _
  // Predicated region
  $region18: #{actor_forward.1} parent=0 // pred_check
    _
  $region19: #{actor_forward.1} parent=0 // pred_check_branch
    %22 = sbr.rel (0) target = $region21
  $region20: #{actor_forward.1} parent=0 // pred_region
    _
  $region21: #{actor_forward.1} parent=0 // pred_fallthru
    _
  // Predicated region
  $region22: #{actor_forward.1} parent=0 // pred_check
    _
  $region23: #{actor_forward.1} parent=0 // pred_check_branch
    %24 = sbr.rel (0) target = $region25
  $region24: #{actor_forward.1} parent=0 // pred_region
    _
  $region25: #{actor_forward.1} parent=0 // pred_fallthru
    _
  // Predicated region
  $region26: #{actor_forward.1} parent=0 // pred_check
    _
  $region27: #{actor_forward.1} parent=0 // pred_check_branch
    %26 = sbr.rel (0) target = $region29
  $region28: #{actor_forward.1} parent=0 // pred_region
    _
  $region29: #{actor_forward.1} parent=0 // pred_fallthru
    _
  // Predicated region
  $region30: #{actor_forward.1} parent=0 // pred_check
    _
  $region31: #{actor_forward.1} parent=0 // pred_check_branch
    %28 = sbr.rel (0) target = $region33
  $region32: #{actor_forward.1} parent=0 // pred_region
    _
  $region33: #{actor_forward.1} parent=0 // pred_fallthru
    _
  %v30 = vld [vmem:[%s0] sm:$0xff]
  %v31 = vld [vmem:[%s0 + $0x8] sm:$0xff]
  %v32 = vpack.c.bf16 %v31, %v30
  %v33 = vld [vmem:[%s2] sm:$0xf]
  %v34 = vld [vmem:[%s2 + $0x4] sm:$0xf]
  %v35 = vld [vmem:[%s3] sm:$0x1]
  %v37 = vlaneseq
  %v38 = vshrl.u32 %v37, 7
  %v39 = vsub.s32 0, %v38
  %v40 = vrot.slane %v35, %v39
  %v44 = vunpack.c.l.b16 %v33
  %v45 = vunpack.c.l.b16 %v34
  %v46 = vpack.c.b16 %v45, %v44
  %vm48 = vcmask 130048
  %v50 = vsel %vm48, %v32, 0
  %52 = vmatprep.subr.bf16.mxu0 0
  %53 = vmatpush1.bf16.msra.mxu0 %v46
  %54 = vmatprep.subr.bf16.mxu0 0
  %55 = vmatpush1.bf16.msra.mxu0 0
  %56 = vmatprep.subr.bf16.mxu0 0
  %57 = vmatpush1.bf16.msra.mxu0 0
  %58 = vmatprep.subr.bf16.mxu0 0
  %59 = vmatpush1.bf16.msra.mxu0 0
  %60 = vmatprep.subr.bf16.mxu0 0
  %61 = vmatpush1.bf16.msra.mxu0 0
  %62 = vmatprep.subr.bf16.mxu0 0
  %63 = vmatpush1.bf16.msra.mxu0 0
  %64 = vmatprep.subr.bf16.mxu0 0
  %65 = vmatpush1.bf16.msra.mxu0 0
  %66 = vmatprep.subr.bf16.mxu0 0
  %67 = vmatpush1.bf16.msra.mxu0 0
  %68 = vmatprep.subr.bf16.mxu0 0
  %69 = vmatpush1.bf16.msra.mxu0 0
  %70 = vmatprep.subr.bf16.mxu0 0
  %71 = vmatpush1.bf16.msra.mxu0 0
  %72 = vmatprep.subr.bf16.mxu0 0
  %73 = vmatpush1.bf16.msra.mxu0 0
  %74 = vmatprep.subr.bf16.mxu0 0
  %75 = vmatpush1.bf16.msra.mxu0 0
  %76 = vmatprep.subr.bf16.mxu0 0
  %77 = vmatpush1.bf16.msra.mxu0 0
  %78 = vmatprep.subr.bf16.mxu0 0
  %79 = vmatpush1.bf16.msra.mxu0 0
  %80 = vmatprep.subr.bf16.mxu0 0
  %81 = vmatpush1.bf16.msra.mxu0 0
  %82 = vmatprep.subr.bf16.mxu0 0
  %83 = vmatpush1.bf16.msra.mxu0 0
  %84 = vmatprep.mubr.bf16.mxu0 0
  %85 = vmatmul.mubr.bf16.gmra.mrb[0].mxu0 %v50
  %v86 = vpop.f32.mrb[0].mxu0
  %v87 = vadd.f32 %v40, %v86
  %v88 = vpop.f32.mrb[0].mxu0
  %v89 = vpop.f32.mrb[0].mxu0
  %v90 = vadd.f32 %v40, %v89
  %v91 = vpop.f32.mrb[0].mxu0
  %92 = vdwg.mxu0
  %v93 = vtanh.pop %v87
  %v94 = vtanh.pop %v90
  %v95 = vpack.c.bf16 %v94, %v93
  %v96 = vld [vmem:[%s4] sm:$0xf]
  %v97 = vld [vmem:[%s4 + $0x4] sm:$0xf]
  %v98 = vld [vmem:[%s4 + $0x8] sm:$0xf]
  %v99 = vld [vmem:[%s4 + $0xc] sm:$0xf]
  %v100 = vld [vmem:[%s5] sm:$0x1]
  %v102 = vlaneseq
  %v103 = vshrl.u32 %v102, 7
  %v104 = vsub.s32 0, %v103
  %v105 = vrot.slane %v100, %v104
  %v111 = vunpack.c.l.b16 %v96
  %v112 = vunpack.c.l.b16 %v97
  %v113 = vunpack.c.l.b16 %v98
  %v114 = vunpack.c.l.b16 %v99
  %v115 = vpack.c.b16 %v112, %v111
  %v116 = vpack.c.b16 %v114, %v113
  %vm119 = vcmask 261120
  %v121 = vsel %vm119, %v95, 0
  %123 = vmatprep.subr.bf16.mxu0 0
  %124 = vmatpush1.bf16.msra.mxu0 %v115
  %125 = vmatprep.subr.bf16.mxu0 0
  %126 = vmatpush1.bf16.msra.mxu0 %v116
  %127 = vmatprep.subr.bf16.mxu0 0
  %128 = vmatpush1.bf16.msra.mxu0 0
  %129 = vmatprep.subr.bf16.mxu0 0
  %130 = vmatpush1.bf16.msra.mxu0 0
  %131 = vmatprep.subr.bf16.mxu0 0
  %132 = vmatpush1.bf16.msra.mxu0 0
  %133 = vmatprep.subr.bf16.mxu0 0
  %134 = vmatpush1.bf16.msra.mxu0 0
  %135 = vmatprep.subr.bf16.mxu0 0
  %136 = vmatpush1.bf16.msra.mxu0 0
  %137 = vmatprep.subr.bf16.mxu0 0
  %138 = vmatpush1.bf16.msra.mxu0 0
  %139 = vmatprep.subr.bf16.mxu0 0
  %140 = vmatpush1.bf16.msra.mxu0 0
  %141 = vmatprep.subr.bf16.mxu0 0
  %142 = vmatpush1.bf16.msra.mxu0 0
  %143 = vmatprep.subr.bf16.mxu0 0
  %144 = vmatpush1.bf16.msra.mxu0 0
  %145 = vmatprep.subr.bf16.mxu0 0
  %146 = vmatpush1.bf16.msra.mxu0 0
  %147 = vmatprep.subr.bf16.mxu0 0
  %148 = vmatpush1.bf16.msra.mxu0 0
  %149 = vmatprep.subr.bf16.mxu0 0
  %150 = vmatpush1.bf16.msra.mxu0 0
  %151 = vmatprep.subr.bf16.mxu0 0
  %152 = vmatpush1.bf16.msra.mxu0 0
  %153 = vmatprep.subr.bf16.mxu0 0
  %154 = vmatpush1.bf16.msra.mxu0 0
  %155 = vmatprep.mubr.bf16.mxu0 0
  %156 = vmatmul.mubr.bf16.gmra.mrb[0].mxu0 %v121
  %v157 = vpop.f32.mrb[0].mxu0
  %v158 = vadd.f32 %v105, %v157
  %v159 = vpop.f32.mrb[0].mxu0
  %v160 = vpop.f32.mrb[0].mxu0
  %v161 = vadd.f32 %v105, %v160
  %v162 = vpop.f32.mrb[0].mxu0
  %163 = vdwg.mxu0
  %v164 = vtanh.pop %v158
  %v165 = vtanh.pop %v161
  %v166 = vpack.c.bf16 %v165, %v164
  %v167 = vld [vmem:[%s6] sm:$0xf]
  %v168 = vld [vmem:[%s6 + $0x4] sm:$0xf]
  %v169 = vld [vmem:[%s6 + $0x8] sm:$0xf]
  %v170 = vld [vmem:[%s6 + $0xc] sm:$0xf]
  %v171 = vld [vmem:[%s7] sm:$0x1]
  %v173 = vlaneseq
  %v174 = vshrl.u32 %v173, 7
  %v175 = vsub.s32 0, %v174
  %v176 = vrot.slane %v171, %v175
  %v182 = vunpack.c.l.b16 %v167
  %v183 = vunpack.c.l.b16 %v168
  %v184 = vunpack.c.l.b16 %v169
  %v185 = vunpack.c.l.b16 %v170
  %v186 = vpack.c.b16 %v183, %v182
  %v187 = vpack.c.b16 %v185, %v184
  %v191 = vsel %vm119, %v166, 0
  %193 = vmatprep.subr.bf16.mxu0 0
  %194 = vmatpush1.bf16.msra.mxu0 %v186
  %195 = vmatprep.subr.bf16.mxu0 0
  %196 = vmatpush1.bf16.msra.mxu0 %v187
  %197 = vmatprep.subr.bf16.mxu0 0
  %198 = vmatpush1.bf16.msra.mxu0 0
  %199 = vmatprep.subr.bf16.mxu0 0
  %200 = vmatpush1.bf16.msra.mxu0 0
  %201 = vmatprep.subr.bf16.mxu0 0
  %202 = vmatpush1.bf16.msra.mxu0 0
  %203 = vmatprep.subr.bf16.mxu0 0
  %204 = vmatpush1.bf16.msra.mxu0 0
  %205 = vmatprep.subr.bf16.mxu0 0
  %206 = vmatpush1.bf16.msra.mxu0 0
  %207 = vmatprep.subr.bf16.mxu0 0
  %208 = vmatpush1.bf16.msra.mxu0 0
  %209 = vmatprep.subr.bf16.mxu0 0
  %210 = vmatpush1.bf16.msra.mxu0 0
  %211 = vmatprep.subr.bf16.mxu0 0
  %212 = vmatpush1.bf16.msra.mxu0 0
  %213 = vmatprep.subr.bf16.mxu0 0
  %214 = vmatpush1.bf16.msra.mxu0 0
  %215 = vmatprep.subr.bf16.mxu0 0
  %216 = vmatpush1.bf16.msra.mxu0 0
  %217 = vmatprep.subr.bf16.mxu0 0
  %218 = vmatpush1.bf16.msra.mxu0 0
  %219 = vmatprep.subr.bf16.mxu0 0
  %220 = vmatpush1.bf16.msra.mxu0 0
  %221 = vmatprep.subr.bf16.mxu0 0
  %222 = vmatpush1.bf16.msra.mxu0 0
  %223 = vmatprep.subr.bf16.mxu0 0
  %224 = vmatpush1.bf16.msra.mxu0 0
  %225 = vmatprep.mubr.bf16.mxu0 0
  %226 = vmatmul.mubr.bf16.gmra.mrb[0].mxu0 %v191
  %v227 = vpop.f32.mrb[0].mxu0
  %v228 = vadd.f32 %v176, %v227
  %v229 = vpop.f32.mrb[0].mxu0
  %v230 = vpop.f32.mrb[0].mxu0
  %v231 = vadd.f32 %v176, %v230
  %v232 = vpop.f32.mrb[0].mxu0
  %233 = vdwg.mxu0
  %234 = vmax.xlane.f32.xlu0 %v228
  %v235 = vpop.xlane.xlu0 %234
  %236 = vmax.xlane.f32.xlu0 %v231
  %v237 = vpop.xlane.xlu0 %236
  %v238 = vsub.f32 %v228, %v235
  %v239 = vsub.f32 %v231, %v237
  %v240 = vmul.f32 %v238, 1.442695
  %v241 = vpow.pop %v240
  %v242 = vmul.f32 %v239, 1.442695
  %v243 = vpow.pop %v242
  %244 = vadd.xlane.f32.xlu0 %v241
  %v245 = vpop.xlane.xlu0 %244
  %246 = vadd.xlane.f32.xlu0 %v243
  %v247 = vpop.xlane.xlu0 %246
  %v248 = vlog2.pop %v245
  %v249 = vmul.f32 %v248, 0.6931472
  %v250 = vlog2.pop %v247
  %v251 = vmul.f32 %v250, 0.6931472
  %v252 = vlaneseq
  %v253 = vand.u32 %v252, 127
  %v254 = vld [vmem:[%s1] sm:$0xff]
  %v255 = vld [vmem:[%s1 + $0x8] sm:$0xff]
  %256 = vset.pattern.permute.xlu0 0
  %257 = vperm.xlu0 %256, %v254
  %v258 = vpop.permute.xlu0 %257
  %259 = vset.pattern.permute.xlu0 0
  %260 = vperm.xlu0 %259, %v255
  %v261 = vpop.permute.xlu0 %260
  %vm262 = vcmp.eq.s32.totalorder %v253, %v258
  %vm263 = vcmp.eq.s32.totalorder %v253, %v261
  %v264 = vsel %vm262, %v238, 0.0
  %v265 = vsel %vm263, %v239, 0.0
  %266 = vadd.xlane.f32.xlu0 %v264
  %v267 = vpop.xlane.xlu0 %266
  %268 = vadd.xlane.f32.xlu0 %v265
  %v269 = vpop.xlane.xlu0 %268
  %v270 = vsub.f32 %v267, %v249
  %v271 = vsub.f32 %v269, %v251
  %vm272 = vcmp.eq.s32.totalorder %v253, 4
  %v273 = vsel %vm272, %v270, %v228
  %v274 = vsel %vm272, %v271, %v231
  %vm275 = vcmask 39936
  %276 = vst.msk [vmem:[%s8] sm:$0xff] %vm275, %v273
  %277 = vst.msk [vmem:[%s8 + $0x8] sm:$0xff] %vm275, %v274
  // Predicated region
  $region34: #{actor_forward.1} parent=0 // pred_check
    _
  $region35: #{actor_forward.1} parent=0 // pred_check_branch
    %279 = sbr.rel (0) target = $region37
  $region36: #{actor_forward.1} parent=0 // pred_region
    _
  $region37: #{actor_forward.1} parent=0 // pred_fallthru
    _
  // Predicated region
  $region38: #{actor_forward.1} parent=0 // pred_check
    _
  $region39: #{actor_forward.1} parent=0 // pred_check_branch
    %281 = sbr.rel (0) target = $region41
  $region40: #{actor_forward.1} parent=0 // pred_region
    _
  $region41: #{actor_forward.1} parent=0 // pred_fallthru
    _

</llo_original>
